<compile_context>
chip_gen: v7x
topology: tpu7x:2x2x1
jax: 0.10.0
libtpu: 0.0.40
codegen_flags: <defaults>
</compile_context>

<pallas_src>
import functools

import jax
import jax.numpy as jnp
from jax.experimental import pallas as pl
from jax.experimental.pallas import tpu as pltpu

LANES = 128
NUM_CORES = 2  # size-2 "parallel" axis -> both TCs on v7x; no-op on 1-TC chips


def _charbonnier_kernel(x_ref, y_ref, out_ref, *, eps, block_rows,
                        blocks_per_core, n_valid, needs_mask):
    c = pl.program_id(0)   # core-split axis ("parallel")
    i = pl.program_id(1)   # streaming / reduction axis ("arbitrary")

    @pl.when(i == 0)
    def _():
        out_ref[...] = jnp.zeros_like(out_ref)

    # Upcast (free VPU work, hidden under the DMA) and compute Charbonnier.
    x = x_ref[...].astype(jnp.float32)
    y = y_ref[...].astype(jnp.float32)
    d = x - y
    val = jnp.sqrt(d * d + jnp.float32(eps))

    if needs_mask:
        # Mask ragged tail / redundant (clamped) blocks by *intended* global
        # element index; masked lanes contribute exactly 0.
        base = (c * blocks_per_core + i) * (block_rows * LANES)
        row = jax.lax.broadcasted_iota(jnp.int32, (block_rows, LANES), 0)
        col = jax.lax.broadcasted_iota(jnp.int32, (block_rows, LANES), 1)
        gidx = base + row * LANES + col
        val = jnp.where(gidx < n_valid, val, jnp.float32(0.0))

    # Fold (block_rows, 128) -> (8, 128) with pure vreg adds and accumulate
    # into the resident output block.  Final cross-lane reduce is done once,
    # outside the kernel.
    out_ref[...] += jnp.sum(val.reshape(block_rows // 8, 8, LANES), axis=0)


def charbonnier_loss(source: jnp.ndarray, target: jnp.ndarray,
                     eps: float = 1e-12,
                     block_rows: int = 2048) -> jnp.ndarray:
    assert source.shape == target.shape, "source/target shapes must match"
    n_elems = source.size
    if n_elems == 0:
        # torch.mean over an empty tensor is NaN.
        return jnp.float32(float("nan"))

    x = source.reshape(-1)
    y = target.reshape(-1)

    # Stream 16/32-bit floats natively; anything else is cast to f32 once.
    if not (jnp.issubdtype(x.dtype, jnp.floating) and x.dtype.itemsize in (2, 4)):
        x = x.astype(jnp.float32)
        y = y.astype(jnp.float32)

    itemsize = jnp.dtype(x.dtype).itemsize
    sublanes = 8 if itemsize == 4 else 16       # bf16/f16 sublane multiple is 16

    # Pad flat length only up to a multiple of (sublanes * 128) so the data can
    # be viewed as (rows, 128).  Pad values are irrelevant (masked in-kernel).
    unit = sublanes * LANES
    pad = (-n_elems) % unit
    if pad:
        x = jnp.pad(x, (0, pad))
        y = jnp.pad(y, (0, pad))
    rows = (n_elems + pad) // LANES
    x2 = x.reshape(rows, LANES)
    y2 = y.reshape(rows, LANES)

    # Effective tile height: sublane-aligned, no larger than the array.
    block_rows = min(block_rows, rows)
    block_rows = max(sublanes, block_rows - block_rows % sublanes)

    n_blocks = pl.cdiv(rows, block_rows)
    blocks_per_core = pl.cdiv(n_blocks, NUM_CORES)
    last_block = n_blocks - 1
    covered = NUM_CORES * blocks_per_core * block_rows * LANES
    needs_mask = covered != n_elems   # static: skip mask math when exact fit

    def in_index(c, i):
        g = c * blocks_per_core + i
        # Clamp fully-out-of-range blocks (odd split / tiny inputs) to the last
        # real block; their contribution is zeroed by the in-kernel mask.
        return (jnp.minimum(g, last_block), 0)

    def out_index(c, i):
        return (c, 0)

    kernel = functools.partial(
        _charbonnier_kernel,
        eps=float(eps),
        block_rows=block_rows,
        blocks_per_core=blocks_per_core,
        n_valid=n_elems,
        needs_mask=needs_mask,
    )

    cost = pl.CostEstimate(
        flops=5 * n_elems,
        transcendentals=n_elems,
        bytes_accessed=2 * rows * LANES * itemsize + NUM_CORES * 8 * LANES * 4,
    )

    partials = pl.pallas_call(
        kernel,
        out_shape=jax.ShapeDtypeStruct((NUM_CORES * 8, LANES), jnp.float32),
        grid_spec=pltpu.PrefetchScalarGridSpec(
            num_scalar_prefetch=0,
            grid=(NUM_CORES, blocks_per_core),
            in_specs=[
                pl.BlockSpec((block_rows, LANES), in_index),
                pl.BlockSpec((block_rows, LANES), in_index),
            ],
            out_specs=pl.BlockSpec((8, LANES), out_index),
        ),
        compiler_params=pltpu.CompilerParams(
            dimension_semantics=("parallel", "arbitrary")),
        cost_estimate=cost,
    )(x2, y2)

    # Single final reduce of the per-core (8,128) partials + mean.
    return jnp.sum(partials) / jnp.float32(n_elems)


def charbonnier_loss_ref(source, target, eps: float = 1e-12):
    d = source.astype(jnp.float32) - target.astype(jnp.float32)
    return jnp.mean(jnp.sqrt(d * d + eps))


if __name__ == "__main__":
    key = jax.random.PRNGKey(0)
    k1, k2 = jax.random.split(key)
    # Small NCHW shapes, consistent with the module's example usage.
    source = jax.random.normal(k1, (2, 4, 16, 16), dtype=jnp.float32)
    target = jax.random.normal(k2, (2, 4, 16, 16), dtype=jnp.float32)

    loss = jax.block_until_ready(charbonnier_loss(source, target))
    ref = jax.block_until_ready(charbonnier_loss_ref(source, target))

    assert jnp.allclose(loss, ref, rtol=1e-5, atol=1e-6), (loss, ref)
    print("KERNEL_OK")
</pallas_src>

<mosaic_0001>
module attributes {stable_mosaic.version = 11 : i64} {
  func.func @_charbonnier_kernel(%arg0: i32, %arg1: i32, %arg2: memref<16x128xf32, #tpu.memory_space<vmem>>, %arg3: memref<16x128xf32, #tpu.memory_space<vmem>>, %arg4: memref<8x128xf32, #tpu.memory_space<vmem>>) attributes {dimension_semantics = [#tpu.dimension_semantics<parallel>, #tpu.dimension_semantics<arbitrary>], iteration_bounds = array<i64: 2, 1>, scalar_prefetch = 0 : i64, scratch_operands = 0 : i64, tpu.core_type = #tpu.core_type<tc>, window_params = [{transform_indices = @transform_0, window_bounds = array<i64: 16, 128>}, {transform_indices = @transform_1, window_bounds = array<i64: 16, 128>}, {transform_indices = @transform_2, window_bounds = array<i64: 8, 128>}]} {
    %c0_i32 = arith.constant 0 : i32
    %0 = arith.cmpi eq, %arg1, %c0_i32 : i32
    %1 = arith.extui %0 : i1 to i32
    %c0_i32_0 = arith.constant 0 : i32
    %2 = arith.cmpi ne, %1, %c0_i32_0 : i32
    scf.if %2 {
      %cst_11 = arith.constant 0.000000e+00 : f32
      %29 = vector.broadcast %cst_11 : f32 to vector<8x128xf32>
      %c0_12 = arith.constant 0 : index
      %c0_13 = arith.constant 0 : index
      %30 = vector.load %arg4[%c0_12, %c0_13] : memref<8x128xf32, #tpu.memory_space<vmem>>, vector<8x128xf32>
      tpu.vector_store %arg4[%c0_12, %c0_13], %29 {strides = array<i32>} : memref<8x128xf32, #tpu.memory_space<vmem>>, vector<8x128xf32>,
    } else {
    }
    %c0 = arith.constant 0 : index
    %c0_1 = arith.constant 0 : index
    %3 = vector.load %arg2[%c0, %c0_1] : memref<16x128xf32, #tpu.memory_space<vmem>>, vector<16x128xf32>
    %c0_2 = arith.constant 0 : index
    %c0_3 = arith.constant 0 : index
    %4 = vector.load %arg3[%c0_2, %c0_3] : memref<16x128xf32, #tpu.memory_space<vmem>>, vector<16x128xf32>
    %5 = arith.subf %3, %4 : vector<16x128xf32>
    %6 = arith.mulf %5, %5 : vector<16x128xf32>
    %cst = arith.constant 9.99999996E-13 : f32
    %7 = vector.broadcast %cst : f32 to vector<16x128xf32>
    %8 = arith.addf %6, %7 : vector<16x128xf32>
    %9 = math.sqrt %8 : vector<16x128xf32>
    %c1_i32 = arith.constant 1 : i32
    %10 = arith.muli %arg0, %c1_i32 : i32
    %11 = arith.addi %10, %arg1 : i32
    %c2048_i32 = arith.constant 2048 : i32
    %12 = arith.muli %11, %c2048_i32 : i32
    %13 = tpu.iota {dimensions = array<i32: 0>} : vector<16x128xi32>
    %14 = tpu.iota {dimensions = array<i32: 1>} : vector<16x128xi32>
    %c128_i32 = arith.constant 128 : i32
    %15 = vector.broadcast %c128_i32 : i32 to vector<16x128xi32>
    %16 = arith.muli %13, %15 : vector<16x128xi32>
    %17 = vector.broadcast %12 : i32 to vector<16x128xi32>
    %18 = arith.addi %17, %16 : vector<16x128xi32>
    %19 = arith.addi %18, %14 : vector<16x128xi32>
    %c2048_i32_4 = arith.constant 2048 : i32
    %20 = vector.broadcast %c2048_i32_4 : i32 to vector<16x128xi32>
    %21 = arith.cmpi slt, %19, %20 : vector<16x128xi32>
    %cst_5 = arith.constant 0.000000e+00 : f32
    %22 = vector.broadcast %cst_5 : f32 to vector<16x128xf32>
    %23 = arith.select %21, %9, %22 : vector<16x128xi1>, vector<16x128xf32>
    %c0_6 = arith.constant 0 : index
    %c0_7 = arith.constant 0 : index
    %24 = vector.load %arg4[%c0_6, %c0_7] : memref<8x128xf32, #tpu.memory_space<vmem>>, vector<8x128xf32>
    %25 = vector.shape_cast %23 : vector<16x128xf32> to vector<2x8x128xf32>
    %cst_8 = arith.constant dense<0.000000e+00> : vector<8x128xf32>
    %26 = vector.multi_reduction <add>, %25, %cst_8 [0] : vector<2x8x128xf32> to vector<8x128xf32>
    %27 = arith.addf %24, %26 : vector<8x128xf32>
    %c0_9 = arith.constant 0 : index
    %c0_10 = arith.constant 0 : index
    %28 = vector.load %arg4[%c0_9, %c0_10] : memref<8x128xf32, #tpu.memory_space<vmem>>, vector<8x128xf32>
    tpu.vector_store %arg4[%c0_9, %c0_10], %27 {strides = array<i32>} : memref<8x128xf32, #tpu.memory_space<vmem>>, vector<8x128xf32>,
    return
  }
  func.func @transform_0(%arg0: i32, %arg1: i32) -> (i32, i32) {
    %c1_i32 = arith.constant 1 : i32
    %0 = arith.muli %arg0, %c1_i32 : i32
    %1 = arith.addi %0, %arg1 : i32
    %c0_i32 = arith.constant 0 : i32
    %2 = arith.minsi %1, %c0_i32 : i32
    %c0_i32_0 = arith.constant 0 : i32
    %c0_i32_1 = arith.constant 0 : i32
    return %2, %c0_i32_0 : i32, i32
  }
  func.func @transform_1(%arg0: i32, %arg1: i32) -> (i32, i32) {
    %c1_i32 = arith.constant 1 : i32
    %0 = arith.muli %arg0, %c1_i32 : i32
    %1 = arith.addi %0, %arg1 : i32
    %c0_i32 = arith.constant 0 : i32
    %2 = arith.minsi %1, %c0_i32 : i32
    %c0_i32_0 = arith.constant 0 : i32
    %c0_i32_1 = arith.constant 0 : i32
    return %2, %c0_i32_0 : i32, i32
  }
  func.func @transform_2(%arg0: i32, %arg1: i32) -> (i32, i32) {
    %c0_i32 = arith.constant 0 : i32
    %c0_i32_0 = arith.constant 0 : i32
    return %arg0, %c0_i32 : i32, i32
  }
}

</mosaic_0001>

<llo_original>
// kernel: tpu_custom_call.1
$region0: #{tpu_custom_call.1}
  #allocation0 [shape = 'u32[]', space=smem, size = 0x4, offset = 0x4, fixed_abs, tag = 'smem constant byte address 0x4 - core index']
  #allocation1 [shape = 'u32[144,128]{1,0:T(1,128)}', space=vmem, size = 0x12000, scoped, tag = 'internal scratch']
  %s0 = inlined_call_operand.hbm [shape: f32[16,128], index: 0, kind: input, shape index: {}]
  %s1 = inlined_call_operand.hbm [shape: f32[16,128], index: 1, kind: input, shape index: {}]
  %s2 = inlined_call_operand.hbm [shape: f32[16,128], index: 2, kind: output, shape index: {}]
  %s3 = sld [smem:[#allocation0]]
  $region53: #{tpu_custom_call.1} parent=0
    _
  %s5 = ssub.s32 1, %s3
  %s6 = scalar_select 0, %s5, %s3
  $region1: #{tpu_custom_call.1} parent=0
    #allocation2 [shape = 'u8[16384]{0}', space=vmem, size = 0x4000, scoped, tag = 'input window, operand 0']
    #allocation3 [shape = 's32[2]{0}', space=sflag, size = 0x8, scoped, tag = 'scoped memory for tpu_custom_call.1']
    #allocation4 [shape = 's32[2]{0}', space=sflag, size = 0x8, scoped, tag = 'scoped memory for tpu_custom_call.1']
    #allocation5 [shape = 'u8[16384]{0}', space=vmem, size = 0x4000, scoped, tag = 'input window, operand 1']
    #allocation6 [shape = 's32[2]{0}', space=sflag, size = 0x8, scoped, tag = 'scoped memory for tpu_custom_call.1']
    #allocation7 [shape = 'u8[8192]{0}', space=vmem, size = 0x2000, scoped, tag = 'output window, operand 0']
    %7 = vsyncpa [#allocation3], 0
    %s8 = scalar_lea.sflag [#allocation3], 1
    %9 = vsyncpa %s8, 0
    %10 = vsyncpa [#allocation6], 0
    %s11 = scalar_lea.sflag [#allocation6], 1
    %12 = vsyncpa %s11, 0
    %13 = vsyncpa [#allocation4], 0
    %s14 = scalar_lea.sflag [#allocation4], 1
    %15 = vsyncpa %s14, 0
    loop: start=0, step=1, limit=4
    $region2: #{tpu_custom_call.1} parent=1 // loop_pre_header
      _
    $region3: #{tpu_custom_call.1} parent=1 // loop_header
      %s17 = sphi 0, %s21
      %p18 = scmp.ge.s32.totalorder %s17, 4
      %s24 = sphi 0, %s36
      %s25 = sphi 0, %s32
      %s26 = sphi 0, %s24
      %s27 = sphi 0, %s25
      %s28 = sphi 0, %s26
      %s29 = sphi 0, %s27
      %s45 = sphi 0, %s47
      %s48 = sphi 0, %s45
      %s49 = sphi 0, %s48
      %s65 = sphi 0, %s49
      %s77 = sphi 0, %s79
      %s80 = sphi 0, %s77
      %s81 = sphi 0, %s80
      %s97 = sphi 0, %s81
      %s103 = sphi 0, %s105
      %s106 = sphi 0, %s103
      %s107 = sphi 0, %s106
      %s123 = sphi 0, %s107
    $region4: #{tpu_custom_call.1} parent=1 // loop_header_branch
      %20 = sbr.rel (%p18) target = $region8
    $region5: #{tpu_custom_call.1} parent=1 // loop_body
      %s22 = ssub.s32 %s17, 1
      %s23 = ssub.s32 %s17, 2
      %s30 = sadd.s32 1, %s25
      %p31 = scmp.ge.s32.totalorder %s30, 1
      %s32 = scalar_select %p31, 0, %s30
      %s33 = sadd.s32 1, %s24
      %s34 = scalar_select %p31, %s33, %s24
      %p35 = scmp.ge.s32.totalorder %s34, 2
      %s36 = scalar_select %p35, 0, %s34
      %s37 = sadd.s32 %s24, %s25
      %p38 = scmp.lt.s32.totalorder %s37, 0
      %s39 = scalar_select %p38, %s37, 0
      %s40 = sadd.s32 %s36, %s32
      %p41 = scmp.lt.s32.totalorder %s40, 0
      %s42 = scalar_select %p41, %s40, 0
      %s43 = ssub.s32 %s39, %s42
      %p44 = scmp.eq.s32.totalorder %s43, 0
      %s46 = sadd.s32 %s45, 1
      %s47 = scalar_select %p44, %s45, %s46
      %p50 = pneg %p44
      %p51 = scmp.eq.s32.totalorder %s17, 1
      %p52 = por %p50, %p51
      %p53 = scmp.ne.s32.totalorder %s45, %s48
      %p54 = scmp.eq.s32.totalorder %s17, 0
      %p55 = por %p53, %p54
      %p56 = scmp.ne.s32.totalorder %s45, %s48
      %p57 = scmp.eq.s32.totalorder %s22, 1
      %p58 = por %p56, %p57
      %p59 = scmp.ne.s32.totalorder %s48, %s49
      %p60 = scmp.eq.s32.totalorder %s22, 0
      %p61 = por %p59, %p60
      %p62 = scmp.ne.s32.totalorder %s48, %s49
      %p63 = scmp.eq.s32.totalorder %s23, 1
      %p64 = por %p62, %p63
      %p66 = scmp.ne.s32.totalorder %s49, %s65
      %p67 = scmp.eq.s32.totalorder %s23, 0
      %p68 = por %p66, %p67
      %s69 = sadd.s32 %s24, %s25
      %p70 = scmp.lt.s32.totalorder %s69, 0
      %s71 = scalar_select %p70, %s69, 0
      %s72 = sadd.s32 %s36, %s32
      %p73 = scmp.lt.s32.totalorder %s72, 0
      %s74 = scalar_select %p73, %s72, 0
      %s75 = ssub.s32 %s71, %s74
      %p76 = scmp.eq.s32.totalorder %s75, 0
      %s78 = sadd.s32 %s77, 1
      %s79 = scalar_select %p76, %s77, %s78
      %p82 = pneg %p76
      %p83 = scmp.eq.s32.totalorder %s17, 1
      %p84 = por %p82, %p83
      %p85 = scmp.ne.s32.totalorder %s77, %s80
      %p86 = scmp.eq.s32.totalorder %s17, 0
      %p87 = por %p85, %p86
      %p88 = scmp.ne.s32.totalorder %s77, %s80
      %p89 = scmp.eq.s32.totalorder %s22, 1
      %p90 = por %p88, %p89
      %p91 = scmp.ne.s32.totalorder %s80, %s81
      %p92 = scmp.eq.s32.totalorder %s22, 0
      %p93 = por %p91, %p92
      %p94 = scmp.ne.s32.totalorder %s80, %s81
      %p95 = scmp.eq.s32.totalorder %s23, 1
      %p96 = por %p94, %p95
      %p98 = scmp.ne.s32.totalorder %s81, %s97
      %p99 = scmp.eq.s32.totalorder %s23, 0
      %p100 = por %p98, %p99
      %s101 = ssub.s32 %s24, %s36
      %p102 = scmp.eq.s32.totalorder %s101, 0
      %s104 = sadd.s32 %s103, 1
      %s105 = scalar_select %p102, %s103, %s104
      %p108 = pneg %p102
      %p109 = scmp.eq.s32.totalorder %s17, 1
      %p110 = por %p108, %p109
      %p111 = scmp.ne.s32.totalorder %s103, %s106
      %p112 = scmp.eq.s32.totalorder %s17, 0
      %p113 = por %p111, %p112
      %p114 = scmp.ne.s32.totalorder %s103, %s106
      %p115 = scmp.eq.s32.totalorder %s22, 1
      %p116 = por %p114, %p115
      %p117 = scmp.ne.s32.totalorder %s106, %s107
      %p118 = scmp.eq.s32.totalorder %s22, 0
      %p119 = por %p117, %p118
      %p120 = scmp.ne.s32.totalorder %s106, %s107
      %p121 = scmp.eq.s32.totalorder %s23, 1
      %p122 = por %p120, %p121
      %p124 = scmp.ne.s32.totalorder %s107, %s123
      %p125 = scmp.eq.s32.totalorder %s23, 0
      %p126 = por %p124, %p125
      %p127 = scmp.le.s32.totalorder 1, %s17
      %p128 = scmp.lt.s32.totalorder %s17, 3
      %p129 = pnand %p127, %p128
      %p130 = pneg %p129
      // Predicated region
      $region9: #{tpu_custom_call.1} parent=5 // pred_check
        _
      $region10: #{tpu_custom_call.1} parent=5 // pred_check_branch
        %132 = sbr.rel (%p129) target = $region12
      $region11: #{tpu_custom_call.1} parent=5 // pred_region
        %s133 = ssub.s32 %s17, 1
      $region12: #{tpu_custom_call.1} parent=5 // pred_fallthru
        _
      %p134 = scmp.lt.s32.totalorder %s17, 2
      // Predicated region
      $region13: #{tpu_custom_call.1} parent=5 // pred_check
        %p135 = pneg %p134
      $region14: #{tpu_custom_call.1} parent=5 // pred_check_branch
        %137 = sbr.rel (%p135) target = $region16
      $region15: #{tpu_custom_call.1} parent=5 // pred_region
        // Predicated region
        $region17: #{tpu_custom_call.1} parent=15 // pred_check
          %p138 = pneg %p55
        $region18: #{tpu_custom_call.1} parent=15 // pred_check_branch
          %140 = sbr.rel (%p138) target = $region20
        $region19: #{tpu_custom_call.1} parent=15 // pred_region
          %s141 = sand.u32 %s45, 1
          %s142 = scalar_lea.sflag [#allocation3], %s141
          %s143 = sand.u32 %s45, 1
          %s144 = smul.addr %s143, 16
          %s145 = scalar_lea.vmem [#allocation2], %s144
          %s146 = sadd.s32 %s24, %s25
          %p147 = scmp.lt.s32.totalorder %s146, 0
          %s148 = scalar_select %p147, %s146, 0
          %s149 = smul.u32 2, %s148
          %s151 = ssub.s32 256, 256
          %152 = vsyncadd %s142, %s151
          %s153 = smul.addr %s149, 128
          %s154 = scalar_lea.hbm %s0, %s153
          %s155 = sshll.u32 %s145, 4
          %s156 = int_to_ptr.vmem [resolvable:$true] %s155
          %161 = dma.hbm_to_vmem [thread:$0]  %s154, 256, %s156, %s142, 128, 128, 8
        $region20: #{tpu_custom_call.1} parent=15 // pred_fallthru
          _
        // Predicated region
        $region21: #{tpu_custom_call.1} parent=15 // pred_check
          %p162 = pneg %p87
        $region22: #{tpu_custom_call.1} parent=15 // pred_check_branch
          %164 = sbr.rel (%p162) target = $region24
        $region23: #{tpu_custom_call.1} parent=15 // pred_region
          %s165 = sand.u32 %s77, 1
          %s166 = scalar_lea.sflag [#allocation6], %s165
          %s167 = sand.u32 %s77, 1
          %s168 = smul.addr %s167, 16
          %s169 = scalar_lea.vmem [#allocation5], %s168
          %s170 = sadd.s32 %s24, %s25
          %p171 = scmp.lt.s32.totalorder %s170, 0
          %s172 = scalar_select %p171, %s170, 0
          %s173 = smul.u32 2, %s172
          %s175 = ssub.s32 256, 256
          %176 = vsyncadd %s166, %s175
          %s177 = smul.addr %s173, 128
          %s178 = scalar_lea.hbm %s1, %s177
          %s179 = sshll.u32 %s169, 4
          %s180 = int_to_ptr.vmem [resolvable:$true] %s179
          %185 = dma.hbm_to_vmem [thread:$0]  %s178, 256, %s180, %s166, 128, 128, 8
        $region24: #{tpu_custom_call.1} parent=15 // pred_fallthru
          _
      $region16: #{tpu_custom_call.1} parent=5 // pred_fallthru
        _
      %p186 = scmp.le.s32.totalorder 1, %s17
      %p187 = scmp.lt.s32.totalorder %s17, 3
      %p188 = pnand %p186, %p187
      %p189 = pneg %p188
      // Predicated region
      $region25: #{tpu_custom_call.1} parent=5 // pred_check
        _
      $region26: #{tpu_custom_call.1} parent=5 // pred_check_branch
        %191 = sbr.rel (%p188) target = $region28
      $region27: #{tpu_custom_call.1} parent=5 // pred_region
        %s192 = ssub.s32 %s17, 1
        %s193 = sand.u32 %s48, 1
        %s194 = scalar_lea.sflag [#allocation3], %s193
        %s195 = sand.u32 %s48, 1
        %s196 = smul.addr %s195, 16
        %s197 = scalar_lea.vmem [#allocation2], %s196
        // Predicated region
        $region29: #{tpu_custom_call.1} parent=27 // pred_check
          %p198 = pneg %p61
        $region30: #{tpu_custom_call.1} parent=27 // pred_check_branch
          %200 = sbr.rel (%p198) target = $region32
        $region31: #{tpu_custom_call.1} parent=27 // pred_region
          %201 = dma.done %s194, 256
        $region32: #{tpu_custom_call.1} parent=27 // pred_fallthru
          _
        %s202 = sand.u32 %s80, 1
        %s203 = scalar_lea.sflag [#allocation6], %s202
        %s204 = sand.u32 %s80, 1
        %s205 = smul.addr %s204, 16
        %s206 = scalar_lea.vmem [#allocation5], %s205
        // Predicated region
        $region33: #{tpu_custom_call.1} parent=27 // pred_check
          %p207 = pneg %p93
        $region34: #{tpu_custom_call.1} parent=27 // pred_check_branch
          %209 = sbr.rel (%p207) target = $region36
        $region35: #{tpu_custom_call.1} parent=27 // pred_region
          %210 = dma.done %s203, 256
        $region36: #{tpu_custom_call.1} parent=27 // pred_fallthru
          _
        %s211 = sand.u32 %s48, 1
        %s212 = scalar_lea.sflag [#allocation3], %s211
        %s213 = sand.u32 %s48, 1
        %s214 = smul.addr %s213, 16
        %s215 = scalar_lea.vmem [#allocation2], %s214
        %p216 = pneg %p61
        %p217 = pneg %p58
        %s218 = sand.u32 %s80, 1
        %s219 = scalar_lea.sflag [#allocation6], %s218
        %s220 = sand.u32 %s80, 1
        %s221 = smul.addr %s220, 16
        %s222 = scalar_lea.vmem [#allocation5], %s221
        %p223 = pneg %p93
        %p224 = pneg %p90
        %p225 = pneg %p119
        %p226 = pneg %p116
        %s227 = sand.u32 %s106, 1
        %s228 = scalar_lea.sflag [#allocation4], %s227
        %s229 = sand.u32 %s106, 1
        %s230 = smul.addr %s229, 8
        %s231 = scalar_lea.vmem [#allocation7], %s230
        %s232 = sadd.s32 %s26, %s27
        %p233 = scmp.lt.s32.totalorder %s232, 0
        %s234 = scalar_select %p233, %s232, 0
        %s235 = smul.u32 2, %s234
        %s236 = sadd.s32 %s26, %s27
        %p237 = scmp.lt.s32.totalorder %s236, 0
        %s238 = scalar_select %p237, %s236, 0
        %s239 = smul.u32 2, %s238
        %p240 = scmp.eq.s32.totalorder %s27, 0
        // Predicated region
        $region37: #{tpu_custom_call.1} parent=27 // pred_check
          %p241 = pneg %p240
        $region38: #{tpu_custom_call.1} parent=27 // pred_check_branch
          %243 = sbr.rel (%p241) target = $region40
        $region39: #{tpu_custom_call.1} parent=27 // pred_region
          %244 = vst [vmem:[%s231] sm:$0xff] 0.0
        $region40: #{tpu_custom_call.1} parent=27 // pred_fallthru
          _
        %v245 = vld [vmem:[%s197] sm:$0xff]
        %v246 = vld [vmem:[%s197 + $0x8] sm:$0xff]
        %v247 = vld [vmem:[%s206] sm:$0xff]
        %v248 = vld [vmem:[%s206 + $0x8] sm:$0xff]
        %v249 = vsub.f32 %v245, %v247
        %v250 = vsub.f32 %v246, %v248
        %v251 = vmul.f32 %v249, %v249
        %v252 = vmul.f32 %v250, %v250
        %v253 = vadd.f32 %v251, 1e-12
        %v254 = vadd.f32 %v252, 1e-12
        %v255 = vrsqrt.pop %v253
        %v256 = vmul.f32 %v253, %v255
        %vm257 = vcmp.eq.f32.partialorder %v253, inf
        %v258 = vsel %vm257, %v253, %v256
        %vm259 = vcmp.eq.f32.partialorder %v253, 0.0
        %v260 = vand.u32 %v253, 2147483648
        %v261 = vsel %vm259, %v260, %v258
        %v262 = vrsqrt.pop %v254
        %v263 = vmul.f32 %v254, %v262
        %vm264 = vcmp.eq.f32.partialorder %v254, inf
        %v265 = vsel %vm264, %v254, %v263
        %vm266 = vcmp.eq.f32.partialorder %v254, 0.0
        %v267 = vand.u32 %v254, 2147483648
        %v268 = vsel %vm266, %v267, %v265
        %s269 = sadd.s32 %s26, %s27
        %s270 = smul.u32 %s269, 2048
        %v271 = vlaneseq
        %v272 = vshrl.u32 %v271, 7
        %v273 = vadd.s32 %v272, 8
        %v274 = vlaneseq
        %v275 = vand.u32 %v274, 127
        %v276 = vmul.u32 %v272, 128
        %v277 = vmul.u32 %v273, 128
        %v278 = vstv %s270
        %v279 = vadd.s32 %v278, %v276
        %v280 = vadd.s32 %v278, %v277
        %v281 = vadd.s32 %v279, %v275
        %v282 = vadd.s32 %v280, %v275
        %vm283 = vcmp.lt.s32.totalorder %v281, 2048
        %vm284 = vcmp.lt.s32.totalorder %v282, 2048
        %v285 = vsel %vm283, %v261, 0.0
        %v286 = vsel %vm284, %v268, 0.0
        %v287 = vld [vmem:[%s231] sm:$0xff]
        %v288 = vadd.f32 %v285, %v286
        %v289 = vadd.f32 %v287, %v288
        %290 = vst [vmem:[%s231] sm:$0xff] %v289
        %s291 = sand.u32 %s106, 1
        %s292 = scalar_lea.sflag [#allocation4], %s291
        %s293 = sand.u32 %s106, 1
        %s294 = smul.addr %s293, 8
        %s295 = scalar_lea.vmem [#allocation7], %s294
        // Predicated region
        $region41: #{tpu_custom_call.1} parent=27 // pred_check
          %p296 = pneg %p116
        $region42: #{tpu_custom_call.1} parent=27 // pred_check_branch
          %298 = sbr.rel (%p296) target = $region44
        $region43: #{tpu_custom_call.1} parent=27 // pred_region
          %s300 = ssub.s32 128, 128
          %301 = vsyncadd %s292, %s300
          %s302 = smul.addr %s26, 128
          %s303 = scalar_lea.hbm %s2, %s302
          %s305 = sshll.u32 %s295, 4
          %s306 = int_to_ptr.vmem [resolvable:$true] %s305
          %308 = dma.vmem_to_hbm [thread:$0]  %s306, 128, %s303, %s292
        $region44: #{tpu_custom_call.1} parent=27 // pred_fallthru
          _
      $region28: #{tpu_custom_call.1} parent=5 // pred_fallthru
        _
      %p309 = scmp.le.s32.totalorder 2, %s17
      // Predicated region
      $region45: #{tpu_custom_call.1} parent=5 // pred_check
        %p310 = pneg %p309
      $region46: #{tpu_custom_call.1} parent=5 // pred_check_branch
        %312 = sbr.rel (%p310) target = $region48
      $region47: #{tpu_custom_call.1} parent=5 // pred_region
        %s313 = ssub.s32 %s17, 2
        // Predicated region
        $region49: #{tpu_custom_call.1} parent=47 // pred_check
          %p314 = pneg %p122
        $region50: #{tpu_custom_call.1} parent=47 // pred_check_branch
          %316 = sbr.rel (%p314) target = $region52
        $region51: #{tpu_custom_call.1} parent=47 // pred_region
          %s317 = sand.u32 %s107, 1
          %s318 = scalar_lea.sflag [#allocation4], %s317
          %s319 = sand.u32 %s107, 1
          %s320 = smul.addr %s319, 8
          %s321 = scalar_lea.vmem [#allocation7], %s320
          %322 = dma.done %s318, 128
        $region52: #{tpu_custom_call.1} parent=47 // pred_fallthru
          _
      $region48: #{tpu_custom_call.1} parent=5 // pred_fallthru
        _
    $region6: #{tpu_custom_call.1} parent=1 // loop_footer
      %s21 = sadd.s32 1, %s17
    $region7: #{tpu_custom_call.1} parent=1 // loop_footer_branch
      %16 = sbr.rel target = $region3
    $region8: #{tpu_custom_call.1} parent=1 // loop_exit
      _
    %323 = vsyncpa [#allocation3], 1
    %s324 = scalar_lea.sflag [#allocation3], 1
    %325 = vsyncpa %s324, 1
    %326 = vsyncpa [#allocation6], 1
    %s327 = scalar_lea.sflag [#allocation6], 1
    %328 = vsyncpa %s327, 1
    %329 = vsyncpa [#allocation4], 1
    %s330 = scalar_lea.sflag [#allocation4], 1
    %331 = vsyncpa %s330, 1

</llo_original>
